<compile_context>
chip_gen: v6e
topology: v6e:2x2x1
jax: 0.10.0
libtpu: 0.0.40
codegen_flags: <defaults>
</compile_context>

<pallas_src>
import functools
import math

import jax
import jax.numpy as jnp
from jax import lax
from jax.experimental import pallas as pl
from jax.experimental.pallas import tpu as pltpu


def bert_self_output_kernel(x_ref, res_ref, w_ref, b_ref, gamma_ref, beta_ref,
                            o_ref, *, eps):
    # Dense: x [tile_m, H_in] @ W^T; W was transposed once in the wrapper to [H_in, H_out],
    # so this is a plain contiguous contraction (no per-step weight relayout). Operands may be
    # bf16; accumulation is forced to f32 on the MXU.
    h = jnp.dot(x_ref[...], w_ref[...], preferred_element_type=jnp.float32)
    h = h + b_ref[...].astype(jnp.float32)

    # Dropout: module is exercised in eval/inference mode -> identity.
    # TODO(synk): training-mode dropout would use pltpu.prng_seed + pltpu.stateful_bernoulli.

    # Residual add (f32).
    y = h + res_ref[...].astype(jnp.float32)

    # LayerNorm over the hidden (lane) axis, all in f32.
    mean = jnp.mean(y, axis=-1, keepdims=True)
    centered = y - mean
    var = jnp.mean(centered * centered, axis=-1, keepdims=True)
    normed = centered * lax.rsqrt(var + eps)
    out = normed * gamma_ref[...].astype(jnp.float32) + beta_ref[...].astype(jnp.float32)
    o_ref[...] = out.astype(o_ref.dtype)


def _vmem_capacity_bytes():
    """Per-core VMEM capacity; guarded fallback only covers the *hardware query*,
    never kernel compile errors (64 MiB = v7x per-TC, the most conservative)."""
    try:
        return int(pltpu.get_tpu_info().vmem_capacity_bytes)
    except Exception:
        return 64 * 1024 * 1024


def _choose_tile_m(M, H, in_itemsize, out_itemsize, budget_bytes, resident_bytes,
                   min_grid_steps=8, max_tile_m=1024):
    """Rows per grid step: largest 8-aligned tile whose double-buffered streams
    (x + residual in stream dtype, out in output dtype) fit the budget after the resident
    parameter blocks, capped so the 'parallel' grid keeps >= min_grid_steps steps (v7x 2 TCs)
    and <= max_tile_m rows (HBM-roofline sweet spot per measured v6e data)."""
    per_row = 2 * (2 * in_itemsize + out_itemsize) * H          # 2 buffers per stream
    avail = max(budget_bytes - resident_bytes, 2 * 1024 * 1024)
    tile_m = int(avail // per_row)
    tile_m = max(8, min((tile_m // 8) * 8, max_tile_m))
    # Keep enough grid steps to feed both TensorCores on v7x (harmless elsewhere).
    target = max(8, ((pl.cdiv(M, min_grid_steps) + 7) // 8) * 8)
    return min(tile_m, target)


def bert_self_output(hidden_states, input_tensor, weight, bias, gamma, beta,
                     *, eps=1e-12, tile_m=None, use_bf16=True):
    """BertSelfOutput forward: LayerNorm(dropout(x @ W^T + b) + residual).

    hidden_states, input_tensor: [B, S, H]; weight: [H_out, H_in] (PyTorch Linear layout).
    use_bf16=True streams activations + weight as bf16 (halved HBM traffic, native MXU rate);
    accumulation / bias / residual / LayerNorm stay f32; output keeps the input dtype.
    """
    B, S, H = hidden_states.shape
    M = B * S
    out_dtype = hidden_states.dtype
    stream_dtype = jnp.bfloat16 if use_bf16 else hidden_states.dtype

    # Flatten the token axis; NO padded copy — the grid's last partial block is masked.
    x2d = hidden_states.reshape(M, H).astype(stream_dtype)
    r2d = input_tensor.reshape(M, H).astype(stream_dtype)
    # One-time wrapper-side transpose + cast (amortized over the whole grid).
    wt = weight.T.astype(stream_dtype)                 # [H_in, H_out]
    b2d = bias.reshape(1, H).astype(jnp.float32)
    g2d = gamma.reshape(1, H).astype(jnp.float32)
    be2d = beta.reshape(1, H).astype(jnp.float32)

    in_itemsize = jnp.dtype(stream_dtype).itemsize
    out_itemsize = jnp.dtype(out_dtype).itemsize

    # Grid-invariant parameter blocks are DMA'd once but double-buffered by default:
    # count the weight twice (real dtype) plus the small f32 bias/gamma/beta blocks.
    resident_bytes = 2 * H * H * in_itemsize + 2 * 3 * H * 4

    cap = _vmem_capacity_bytes()
    if tile_m is None:
        tile_m = _choose_tile_m(M, H, in_itemsize, out_itemsize,
                                budget_bytes=int(cap * 0.55),
                                resident_bytes=resident_bytes)
    tile_m = max(8, (int(tile_m) // 8) * 8)            # sublane (8) alignment

    grid = (pl.cdiv(M, tile_m),)

    # Explicit VMEM ceiling consistent with the tiling heuristic: the default scoped limits
    # (16 MiB v5e, 32 MiB v6e/v7x) would otherwise silently cap what the heuristic assumed.
    est_usage = resident_bytes + 2 * tile_m * H * (2 * in_itemsize + out_itemsize)
    vmem_limit = int(min(cap * 0.9, est_usage + (16 << 20)))

    kernel = functools.partial(bert_self_output_kernel, eps=eps)
    out2d = pl.pallas_call(
        kernel,
        out_shape=jax.ShapeDtypeStruct((M, H), out_dtype),
        grid_spec=pltpu.PrefetchScalarGridSpec(
            num_scalar_prefetch=0,
            grid=grid,
            in_specs=[
                pl.BlockSpec((tile_m, H), lambda i: (i, 0)),   # x tile (streamed)
                pl.BlockSpec((tile_m, H), lambda i: (i, 0)),   # residual tile (streamed)
                pl.BlockSpec((H, H), lambda i: (0, 0)),        # W^T (grid-invariant, fetched once)
                pl.BlockSpec((1, H), lambda i: (0, 0)),        # bias
                pl.BlockSpec((1, H), lambda i: (0, 0)),        # gamma
                pl.BlockSpec((1, H), lambda i: (0, 0)),        # beta
            ],
            out_specs=pl.BlockSpec((tile_m, H), lambda i: (i, 0)),
        ),
        compiler_params=pltpu.CompilerParams(
            dimension_semantics=("parallel",),
            vmem_limit_bytes=vmem_limit),
    )(x2d, r2d, wt, b2d, g2d, be2d)

    return out2d.reshape(B, S, H)


if __name__ == "__main__":
    # Small config: batch=2, seq=9 (ragged M=18 exercises the masked partial tile), hidden=128.
    B, S, H = 2, 9, 128
    eps = 1e-12

    key = jax.random.PRNGKey(0)
    k1, k2, k3, k4 = jax.random.split(key, 4)

    hidden_states = jax.random.normal(k1, (B, S, H), dtype=jnp.float32)
    input_tensor = jax.random.normal(k2, (B, S, H), dtype=jnp.float32)

    # PyTorch Linear layout: weight [out, in]; deterministic init.
    bound = 1.0 / math.sqrt(H)
    weight = jax.random.uniform(k3, (H, H), dtype=jnp.float32,
                                minval=-bound, maxval=bound)
    bias = jax.random.uniform(k4, (H,), dtype=jnp.float32,
                              minval=-bound, maxval=bound)
    gamma = jnp.ones((H,), dtype=jnp.float32)
    beta = jnp.zeros((H,), dtype=jnp.float32)

    # Pure-JAX reference (dropout is identity in eval mode).
    dense = jnp.einsum('bsh,oh->bso', hidden_states, weight) + bias
    y = dense + input_tensor
    mu = jnp.mean(y, axis=-1, keepdims=True)
    var = jnp.mean((y - mu) ** 2, axis=-1, keepdims=True)
    ref = (y - mu) * lax.rsqrt(var + eps) * gamma + beta

    # Exact-semantics path (f32 streaming + f32 MXU), small tile -> multi-step grid with a
    # partial (masked) last block.
    out_f32 = bert_self_output(hidden_states, input_tensor, weight, bias, gamma, beta,
                               eps=eps, tile_m=8, use_bf16=False)
    out_f32 = jax.block_until_ready(out_f32)
    assert out_f32.shape == (B, S, H)
    assert jnp.allclose(out_f32, ref, atol=1e-5, rtol=1e-5), "mismatch vs reference (f32 path)"

    # Default production path: bf16 streaming + bf16 MXU operands, auto tile_m, f32 accum + LN.
    out_bf16 = bert_self_output(hidden_states, input_tensor, weight, bias, gamma, beta, eps=eps)
    out_bf16 = jax.block_until_ready(out_bf16)
    assert out_bf16.shape == (B, S, H)
    assert jnp.allclose(out_bf16, ref, atol=1e-1, rtol=1e-1), "mismatch vs reference (bf16 path)"

    print("KERNEL_OK")
</pallas_src>

<mosaic_0001>
module attributes {stable_mosaic.version = 11 : i64} {
  func.func @bert_self_output_kernel(%arg0: i32, %arg1: memref<8x128xf32, #tpu.memory_space<vmem>>, %arg2: memref<8x128xf32, #tpu.memory_space<vmem>>, %arg3: memref<128x128xf32, #tpu.memory_space<vmem>>, %arg4: memref<1x128xf32, #tpu.memory_space<vmem>>, %arg5: memref<1x128xf32, #tpu.memory_space<vmem>>, %arg6: memref<1x128xf32, #tpu.memory_space<vmem>>, %arg7: memref<8x128xf32, #tpu.memory_space<vmem>>) attributes {dimension_semantics = [#tpu.dimension_semantics<parallel>], iteration_bounds = array<i64: 3>, scalar_prefetch = 0 : i64, scratch_operands = 0 : i64, tpu.core_type = #tpu.core_type<tc>, window_params = [{transform_indices = @transform_0, window_bounds = array<i64: 8, 128>}, {transform_indices = @transform_1, window_bounds = array<i64: 8, 128>}, {pipeline_mode = #tpu.pipeline_mode<synchronous>, transform_indices = @transform_2, window_bounds = array<i64: 128, 128>}, {pipeline_mode = #tpu.pipeline_mode<synchronous>, transform_indices = @transform_3, window_bounds = array<i64: 1, 128>}, {pipeline_mode = #tpu.pipeline_mode<synchronous>, transform_indices = @transform_4, window_bounds = array<i64: 1, 128>}, {pipeline_mode = #tpu.pipeline_mode<synchronous>, transform_indices = @transform_5, window_bounds = array<i64: 1, 128>}, {transform_indices = @transform_6, window_bounds = array<i64: 8, 128>}]} {
    %c0 = arith.constant 0 : index
    %c0_0 = arith.constant 0 : index
    %0 = vector.load %arg1[%c0, %c0_0] : memref<8x128xf32, #tpu.memory_space<vmem>>, vector<8x128xf32>
    %c0_1 = arith.constant 0 : index
    %c0_2 = arith.constant 0 : index
    %1 = vector.load %arg3[%c0_1, %c0_2] : memref<128x128xf32, #tpu.memory_space<vmem>>, vector<128x128xf32>
    %cst = arith.constant dense<0.000000e+00> : vector<8x128xf32>
    %2 = tpu.matmul %0, %1, %cst {dimension_numbers = #tpu.dot_dimension_numbers<[1], [0], [0], [1], [0, 0, 1, 1], [], []>} : vector<8x128xf32>, vector<128x128xf32>, vector<8x128xf32> -> vector<8x128xf32>
    %c0_3 = arith.constant 0 : index
    %c0_4 = arith.constant 0 : index
    %3 = vector.load %arg4[%c0_3, %c0_4] : memref<1x128xf32, #tpu.memory_space<vmem>>, vector<1x128xf32>
    %4 = vector.broadcast %3 : vector<1x128xf32> to vector<8x128xf32>
    %5 = arith.addf %2, %4 : vector<8x128xf32>
    %c0_5 = arith.constant 0 : index
    %c0_6 = arith.constant 0 : index
    %6 = vector.load %arg2[%c0_5, %c0_6] : memref<8x128xf32, #tpu.memory_space<vmem>>, vector<8x128xf32>
    %7 = arith.addf %5, %6 : vector<8x128xf32>
    %cst_7 = arith.constant dense<0.000000e+00> : vector<8xf32>
    %8 = vector.multi_reduction <add>, %7, %cst_7 [1] : vector<8x128xf32> to vector<8xf32>
    %9 = vector.shape_cast %8 : vector<8xf32> to vector<8x1xf32>
    %cst_8 = arith.constant 1.280000e+02 : f32
    %10 = vector.broadcast %cst_8 : f32 to vector<8x1xf32>
    %11 = arith.divf %9, %10 : vector<8x1xf32>
    %12 = vector.broadcast %11 : vector<8x1xf32> to vector<8x128xf32>
    %13 = arith.subf %7, %12 : vector<8x128xf32>
    %14 = arith.mulf %13, %13 : vector<8x128xf32>
    %cst_9 = arith.constant dense<0.000000e+00> : vector<8xf32>
    %15 = vector.multi_reduction <add>, %14, %cst_9 [1] : vector<8x128xf32> to vector<8xf32>
    %16 = vector.shape_cast %15 : vector<8xf32> to vector<8x1xf32>
    %cst_10 = arith.constant 1.280000e+02 : f32
    %17 = vector.broadcast %cst_10 : f32 to vector<8x1xf32>
    %18 = arith.divf %16, %17 : vector<8x1xf32>
    %cst_11 = arith.constant 9.99999996E-13 : f32
    %19 = vector.broadcast %cst_11 : f32 to vector<8x1xf32>
    %20 = arith.addf %18, %19 : vector<8x1xf32>
    %21 = math.rsqrt %20 : vector<8x1xf32>
    %22 = vector.broadcast %21 : vector<8x1xf32> to vector<8x128xf32>
    %23 = arith.mulf %13, %22 : vector<8x128xf32>
    %c0_12 = arith.constant 0 : index
    %c0_13 = arith.constant 0 : index
    %24 = vector.load %arg5[%c0_12, %c0_13] : memref<1x128xf32, #tpu.memory_space<vmem>>, vector<1x128xf32>
    %25 = vector.broadcast %24 : vector<1x128xf32> to vector<8x128xf32>
    %26 = arith.mulf %23, %25 : vector<8x128xf32>
    %c0_14 = arith.constant 0 : index
    %c0_15 = arith.constant 0 : index
    %27 = vector.load %arg6[%c0_14, %c0_15] : memref<1x128xf32, #tpu.memory_space<vmem>>, vector<1x128xf32>
    %28 = vector.broadcast %27 : vector<1x128xf32> to vector<8x128xf32>
    %29 = arith.addf %26, %28 : vector<8x128xf32>
    %c0_16 = arith.constant 0 : index
    %c0_17 = arith.constant 0 : index
    %30 = vector.load %arg7[%c0_16, %c0_17] : memref<8x128xf32, #tpu.memory_space<vmem>>, vector<8x128xf32>
    tpu.vector_store %arg7[%c0_16, %c0_17], %29 {strides = array<i32>} : memref<8x128xf32, #tpu.memory_space<vmem>>, vector<8x128xf32>,
    return
  }
  func.func @transform_0(%arg0: i32) -> (i32, i32) {
    %c0_i32 = arith.constant 0 : i32
    %c0_i32_0 = arith.constant 0 : i32
    return %arg0, %c0_i32 : i32, i32
  }
  func.func @transform_1(%arg0: i32) -> (i32, i32) {
    %c0_i32 = arith.constant 0 : i32
    %c0_i32_0 = arith.constant 0 : i32
    return %arg0, %c0_i32 : i32, i32
  }
  func.func @transform_2(%arg0: i32) -> (i32, i32) {
    %c0_i32 = arith.constant 0 : i32
    %c0_i32_0 = arith.constant 0 : i32
    %c0_i32_1 = arith.constant 0 : i32
    return %c0_i32, %c0_i32_0 : i32, i32
  }
  func.func @transform_3(%arg0: i32) -> (i32, i32) {
    %c0_i32 = arith.constant 0 : i32
    %c0_i32_0 = arith.constant 0 : i32
    %c0_i32_1 = arith.constant 0 : i32
    return %c0_i32, %c0_i32_0 : i32, i32
  }
  func.func @transform_4(%arg0: i32) -> (i32, i32) {
    %c0_i32 = arith.constant 0 : i32
    %c0_i32_0 = arith.constant 0 : i32
    %c0_i32_1 = arith.constant 0 : i32
    return %c0_i32, %c0_i32_0 : i32, i32
  }
  func.func @transform_5(%arg0: i32) -> (i32, i32) {
    %c0_i32 = arith.constant 0 : i32
    %c0_i32_0 = arith.constant 0 : i32
    %c0_i32_1 = arith.constant 0 : i32
    return %c0_i32, %c0_i32_0 : i32, i32
  }
  func.func @transform_6(%arg0: i32) -> (i32, i32) {
    %c0_i32 = arith.constant 0 : i32
    %c0_i32_0 = arith.constant 0 : i32
    return %arg0, %c0_i32 : i32, i32
  }
}

</mosaic_0001>

<llo_original>
// kernel: tpu_custom_call.1
$region0: #{tpu_custom_call.1}
  #allocation0 [shape = 'u32[]', space=smem, size = 0x4, offset = 0x4, fixed_abs, tag = 'smem constant byte address 0x4 - core index']
  #allocation1 [shape = 'u32[144,128]{1,0:T(1,128)}', space=vmem, size = 0x12000, scoped, tag = 'internal scratch']
  %s0 = inlined_call_operand.hbm [shape: f32[18,128], index: 0, kind: input, shape index: {}]
  %s1 = inlined_call_operand.hbm [shape: f32[18,128], index: 1, kind: input, shape index: {}]
  %s2 = inlined_call_operand.hbm [shape: f32[128,128], index: 2, kind: input, shape index: {}]
  %s3 = inlined_call_operand.vmem [shape: f32[1,128], index: 3, kind: input, shape index: {}]
  %s4 = inlined_call_operand.vmem [shape: f32[1,128], index: 4, kind: input, shape index: {}]
  %s5 = inlined_call_operand.vmem [shape: f32[1,128], index: 5, kind: input, shape index: {}]
  %s6 = inlined_call_operand.hbm [shape: f32[18,128], index: 6, kind: output, shape index: {}]
  %s7 = sld [smem:[#allocation0]]
  $region69: #{tpu_custom_call.1} parent=0
    _
  %s9 = ssub.s32 1, %s7
  %s10 = scalar_select 0, %s9, %s7
  $region1: #{tpu_custom_call.1} parent=0
    #allocation2 [shape = 'u8[8192]{0}', space=vmem, size = 0x2000, scoped, tag = 'input window, operand 0']
    #allocation3 [shape = 's32[2]{0}', space=sflag, size = 0x8, scoped, tag = 'scoped memory for tpu_custom_call.1']
    #allocation4 [shape = 's32[2]{0}', space=sflag, size = 0x8, scoped, tag = 'scoped memory for tpu_custom_call.1']
    #allocation5 [shape = 'u8[8192]{0}', space=vmem, size = 0x2000, scoped, tag = 'input window, operand 1']
    #allocation6 [shape = 's32[2]{0}', space=sflag, size = 0x8, scoped, tag = 'scoped memory for tpu_custom_call.1']
    #allocation7 [shape = 'u8[65536]{0}', space=vmem, size = 0x10000, scoped, tag = 'input window, operand 2, single buffered']
    #allocation8 [shape = 'u8[8192]{0}', space=vmem, size = 0x2000, scoped, tag = 'output window, operand 0']
    %11 = vsyncpa [#allocation3], 0
    %s12 = scalar_lea.sflag [#allocation3], 1
    %13 = vsyncpa %s12, 0
    %14 = vsyncpa [#allocation6], 0
    %s15 = scalar_lea.sflag [#allocation6], 1
    %16 = vsyncpa %s15, 0
    %17 = vsyncpa [#allocation4], 0
    %s18 = scalar_lea.sflag [#allocation4], 1
    %19 = vsyncpa %s18, 0
    loop: start=0, step=1, limit=5
    $region2: #{tpu_custom_call.1} parent=1 // loop_pre_header
      _
    $region3: #{tpu_custom_call.1} parent=1 // loop_header
      %s21 = sphi 0, %s25
      %p22 = scmp.ge.s32.totalorder %s21, 5
      %s31 = sphi 0, %s33
      %s34 = sphi 0, %s31
      %s35 = sphi 0, %s34
      %s51 = sphi 0, %s35
      %s57 = sphi 0, %s59
      %s60 = sphi 0, %s57
      %s61 = sphi 0, %s60
      %s77 = sphi 0, %s61
      %s81 = sphi 0, %s81
      %s83 = sphi 0, %s81
      %s84 = sphi 0, %s83
      %s98 = sphi 0, %s84
      %s102 = sphi 0, %s102
      %s104 = sphi 0, %s102
      %s105 = sphi 0, %s104
      %s119 = sphi 0, %s105
      %s123 = sphi 0, %s123
      %s125 = sphi 0, %s123
      %s126 = sphi 0, %s125
      %s140 = sphi 0, %s126
      %s144 = sphi 0, %s144
      %s146 = sphi 0, %s144
      %s147 = sphi 0, %s146
      %s161 = sphi 0, %s147
      %s167 = sphi 0, %s169
      %s170 = sphi 0, %s167
      %s171 = sphi 0, %s170
      %s187 = sphi 0, %s171
    $region4: #{tpu_custom_call.1} parent=1 // loop_header_branch
      %24 = sbr.rel (%p22) target = $region8
    $region5: #{tpu_custom_call.1} parent=1 // loop_body
      %s26 = ssub.s32 %s21, 1
      %s27 = ssub.s32 %s21, 2
      %s28 = sadd.s32 %s21, 1
      %s29 = ssub.s32 %s21, %s28
      %p30 = scmp.eq.s32.totalorder %s29, 0
      %s32 = sadd.s32 %s31, 1
      %s33 = scalar_select %p30, %s31, %s32
      %p36 = pneg %p30
      %p37 = scmp.eq.s32.totalorder %s21, 2
      %p38 = por %p36, %p37
      %p39 = scmp.ne.s32.totalorder %s31, %s34
      %p40 = scmp.eq.s32.totalorder %s21, 0
      %p41 = por %p39, %p40
      %p42 = scmp.ne.s32.totalorder %s31, %s34
      %p43 = scmp.eq.s32.totalorder %s26, 2
      %p44 = por %p42, %p43
      %p45 = scmp.ne.s32.totalorder %s34, %s35
      %p46 = scmp.eq.s32.totalorder %s26, 0
      %p47 = por %p45, %p46
      %p48 = scmp.ne.s32.totalorder %s34, %s35
      %p49 = scmp.eq.s32.totalorder %s27, 2
      %p50 = por %p48, %p49
      %p52 = scmp.ne.s32.totalorder %s35, %s51
      %p53 = scmp.eq.s32.totalorder %s27, 0
      %p54 = por %p52, %p53
      %s55 = ssub.s32 %s21, %s28
      %p56 = scmp.eq.s32.totalorder %s55, 0
      %s58 = sadd.s32 %s57, 1
      %s59 = scalar_select %p56, %s57, %s58
      %p62 = pneg %p56
      %p63 = scmp.eq.s32.totalorder %s21, 2
      %p64 = por %p62, %p63
      %p65 = scmp.ne.s32.totalorder %s57, %s60
      %p66 = scmp.eq.s32.totalorder %s21, 0
      %p67 = por %p65, %p66
      %p68 = scmp.ne.s32.totalorder %s57, %s60
      %p69 = scmp.eq.s32.totalorder %s26, 2
      %p70 = por %p68, %p69
      %p71 = scmp.ne.s32.totalorder %s60, %s61
      %p72 = scmp.eq.s32.totalorder %s26, 0
      %p73 = por %p71, %p72
      %p74 = scmp.ne.s32.totalorder %s60, %s61
      %p75 = scmp.eq.s32.totalorder %s27, 2
      %p76 = por %p74, %p75
      %p78 = scmp.ne.s32.totalorder %s61, %s77
      %p79 = scmp.eq.s32.totalorder %s27, 0
      %p80 = por %p78, %p79
      %s82 = sadd.s32 %s81, 1
      %p85 = scmp.eq.s32.totalorder %s21, 2
      %p86 = scmp.ne.s32.totalorder %s81, %s83
      %p87 = scmp.eq.s32.totalorder %s21, 0
      %p88 = por %p86, %p87
      %p89 = scmp.ne.s32.totalorder %s81, %s83
      %p90 = scmp.eq.s32.totalorder %s26, 2
      %p91 = por %p89, %p90
      %p92 = scmp.ne.s32.totalorder %s83, %s84
      %p93 = scmp.eq.s32.totalorder %s26, 0
      %p94 = por %p92, %p93
      %p95 = scmp.ne.s32.totalorder %s83, %s84
      %p96 = scmp.eq.s32.totalorder %s27, 2
      %p97 = por %p95, %p96
      %p99 = scmp.ne.s32.totalorder %s84, %s98
      %p100 = scmp.eq.s32.totalorder %s27, 0
      %p101 = por %p99, %p100
      %s103 = sadd.s32 %s102, 1
      %p106 = scmp.eq.s32.totalorder %s21, 2
      %p107 = scmp.ne.s32.totalorder %s102, %s104
      %p108 = scmp.eq.s32.totalorder %s21, 0
      %p109 = por %p107, %p108
      %p110 = scmp.ne.s32.totalorder %s102, %s104
      %p111 = scmp.eq.s32.totalorder %s26, 2
      %p112 = por %p110, %p111
      %p113 = scmp.ne.s32.totalorder %s104, %s105
      %p114 = scmp.eq.s32.totalorder %s26, 0
      %p115 = por %p113, %p114
      %p116 = scmp.ne.s32.totalorder %s104, %s105
      %p117 = scmp.eq.s32.totalorder %s27, 2
      %p118 = por %p116, %p117
      %p120 = scmp.ne.s32.totalorder %s105, %s119
      %p121 = scmp.eq.s32.totalorder %s27, 0
      %p122 = por %p120, %p121
      %s124 = sadd.s32 %s123, 1
      %p127 = scmp.eq.s32.totalorder %s21, 2
      %p128 = scmp.ne.s32.totalorder %s123, %s125
      %p129 = scmp.eq.s32.totalorder %s21, 0
      %p130 = por %p128, %p129
      %p131 = scmp.ne.s32.totalorder %s123, %s125
      %p132 = scmp.eq.s32.totalorder %s26, 2
      %p133 = por %p131, %p132
      %p134 = scmp.ne.s32.totalorder %s125, %s126
      %p135 = scmp.eq.s32.totalorder %s26, 0
      %p136 = por %p134, %p135
      %p137 = scmp.ne.s32.totalorder %s125, %s126
      %p138 = scmp.eq.s32.totalorder %s27, 2
      %p139 = por %p137, %p138
      %p141 = scmp.ne.s32.totalorder %s126, %s140
      %p142 = scmp.eq.s32.totalorder %s27, 0
      %p143 = por %p141, %p142
      %s145 = sadd.s32 %s144, 1
      %p148 = scmp.eq.s32.totalorder %s21, 2
      %p149 = scmp.ne.s32.totalorder %s144, %s146
      %p150 = scmp.eq.s32.totalorder %s21, 0
      %p151 = por %p149, %p150
      %p152 = scmp.ne.s32.totalorder %s144, %s146
      %p153 = scmp.eq.s32.totalorder %s26, 2
      %p154 = por %p152, %p153
      %p155 = scmp.ne.s32.totalorder %s146, %s147
      %p156 = scmp.eq.s32.totalorder %s26, 0
      %p157 = por %p155, %p156
      %p158 = scmp.ne.s32.totalorder %s146, %s147
      %p159 = scmp.eq.s32.totalorder %s27, 2
      %p160 = por %p158, %p159
      %p162 = scmp.ne.s32.totalorder %s147, %s161
      %p163 = scmp.eq.s32.totalorder %s27, 0
      %p164 = por %p162, %p163
      %s165 = ssub.s32 %s21, %s28
      %p166 = scmp.eq.s32.totalorder %s165, 0
      %s168 = sadd.s32 %s167, 1
      %s169 = scalar_select %p166, %s167, %s168
      %p172 = pneg %p166
      %p173 = scmp.eq.s32.totalorder %s21, 2
      %p174 = por %p172, %p173
      %p175 = scmp.ne.s32.totalorder %s167, %s170
      %p176 = scmp.eq.s32.totalorder %s21, 0
      %p177 = por %p175, %p176
      %p178 = scmp.ne.s32.totalorder %s167, %s170
      %p179 = scmp.eq.s32.totalorder %s26, 2
      %p180 = por %p178, %p179
      %p181 = scmp.ne.s32.totalorder %s170, %s171
      %p182 = scmp.eq.s32.totalorder %s26, 0
      %p183 = por %p181, %p182
      %p184 = scmp.ne.s32.totalorder %s170, %s171
      %p185 = scmp.eq.s32.totalorder %s27, 2
      %p186 = por %p184, %p185
      %p188 = scmp.ne.s32.totalorder %s171, %s187
      %p189 = scmp.eq.s32.totalorder %s27, 0
      %p190 = por %p188, %p189
      %p191 = scmp.le.s32.totalorder 1, %s21
      %p192 = scmp.lt.s32.totalorder %s21, 4
      %p193 = pnand %p191, %p192
      %p194 = pneg %p193
      // Predicated region
      $region9: #{tpu_custom_call.1} parent=5 // pred_check
        _
      $region10: #{tpu_custom_call.1} parent=5 // pred_check_branch
        %196 = sbr.rel (%p193) target = $region12
      $region11: #{tpu_custom_call.1} parent=5 // pred_region
        %s197 = ssub.s32 %s21, 1
        // Predicated region
        $region13: #{tpu_custom_call.1} parent=11 // pred_check
          %p198 = pneg %p94
        $region14: #{tpu_custom_call.1} parent=11 // pred_check_branch
          %200 = sbr.rel (%p198) target = $region16
        $region15: #{tpu_custom_call.1} parent=11 // pred_region
          %s202 = ssub.s32 2048, 2048
          %203 = vsyncadd [#allocation6], %s202
          %s204 = sshll.u32 [#allocation7], 4
          %s205 = int_to_ptr.vmem [resolvable:$true] %s204
          %210 = dma.hbm_to_vmem [thread:$0]  %s2, 2048, %s205, [#allocation6], 128, 128, 8
        $region16: #{tpu_custom_call.1} parent=11 // pred_fallthru
          _
        // Predicated region
        $region17: #{tpu_custom_call.1} parent=11 // pred_check
          %p211 = pneg %p115
        $region18: #{tpu_custom_call.1} parent=11 // pred_check_branch
          %213 = sbr.rel (%p211) target = $region20
        $region19: #{tpu_custom_call.1} parent=11 // pred_region
          _
        $region20: #{tpu_custom_call.1} parent=11 // pred_fallthru
          _
        // Predicated region
        $region21: #{tpu_custom_call.1} parent=11 // pred_check
          %p214 = pneg %p136
        $region22: #{tpu_custom_call.1} parent=11 // pred_check_branch
          %216 = sbr.rel (%p214) target = $region24
        $region23: #{tpu_custom_call.1} parent=11 // pred_region
          _
        $region24: #{tpu_custom_call.1} parent=11 // pred_fallthru
          _
        // Predicated region
        $region25: #{tpu_custom_call.1} parent=11 // pred_check
          %p217 = pneg %p157
        $region26: #{tpu_custom_call.1} parent=11 // pred_check_branch
          %219 = sbr.rel (%p217) target = $region28
        $region27: #{tpu_custom_call.1} parent=11 // pred_region
          _
        $region28: #{tpu_custom_call.1} parent=11 // pred_fallthru
          _
      $region12: #{tpu_custom_call.1} parent=5 // pred_fallthru
        _
      %p220 = scmp.lt.s32.totalorder %s21, 3
      // Predicated region
      $region29: #{tpu_custom_call.1} parent=5 // pred_check
        %p221 = pneg %p220
      $region30: #{tpu_custom_call.1} parent=5 // pred_check_branch
        %223 = sbr.rel (%p221) target = $region32
      $region31: #{tpu_custom_call.1} parent=5 // pred_region
        // Predicated region
        $region33: #{tpu_custom_call.1} parent=31 // pred_check
          %p224 = pneg %p41
        $region34: #{tpu_custom_call.1} parent=31 // pred_check_branch
          %226 = sbr.rel (%p224) target = $region36
        $region35: #{tpu_custom_call.1} parent=31 // pred_region
          %s227 = sand.u32 %s31, 1
          %s228 = scalar_lea.sflag [#allocation3], %s227
          %s229 = sand.u32 %s31, 1
          %s230 = smul.addr %s229, 8
          %s231 = scalar_lea.vmem [#allocation2], %s230
          %s233 = ssub.s32 128, 128
          %234 = vsyncadd %s228, %s233
          %s235 = smul.addr %s21, 128
          %s236 = scalar_lea.hbm %s0, %s235
          %s238 = sshll.u32 %s231, 4
          %s239 = int_to_ptr.vmem [resolvable:$true] %s238
          %241 = dma.hbm_to_vmem [thread:$0]  %s236, 128, %s239, %s228
        $region36: #{tpu_custom_call.1} parent=31 // pred_fallthru
          _
        // Predicated region
        $region37: #{tpu_custom_call.1} parent=31 // pred_check
          %p242 = pneg %p67
        $region38: #{tpu_custom_call.1} parent=31 // pred_check_branch
          %244 = sbr.rel (%p242) target = $region40
        $region39: #{tpu_custom_call.1} parent=31 // pred_region
          %s245 = sand.u32 %s21, 1
          %s246 = scalar_lea.sflag [#allocation6], %s245
          %s247 = sand.u32 %s57, 1
          %s248 = smul.addr %s247, 8
          %s249 = scalar_lea.vmem [#allocation5], %s248
          %s251 = ssub.s32 128, 128
          %252 = vsyncadd %s246, %s251
          %s253 = smul.addr %s21, 128
          %s254 = scalar_lea.hbm %s1, %s253
          %s256 = sshll.u32 %s249, 4
          %s257 = int_to_ptr.vmem [resolvable:$true] %s256
          %259 = dma.hbm_to_vmem [thread:$0]  %s254, 128, %s257, %s246
        $region40: #{tpu_custom_call.1} parent=31 // pred_fallthru
          _
      $region32: #{tpu_custom_call.1} parent=5 // pred_fallthru
        _
      %p260 = scmp.le.s32.totalorder 1, %s21
      %p261 = scmp.lt.s32.totalorder %s21, 4
      %p262 = pnand %p260, %p261
      %p263 = pneg %p262
      // Predicated region
      $region41: #{tpu_custom_call.1} parent=5 // pred_check
        _
      $region42: #{tpu_custom_call.1} parent=5 // pred_check_branch
        %265 = sbr.rel (%p262) target = $region44
      $region43: #{tpu_custom_call.1} parent=5 // pred_region
        %s266 = ssub.s32 %s21, 1
        %s267 = sand.u32 %s34, 1
        %s268 = scalar_lea.sflag [#allocation3], %s267
        %s269 = sand.u32 %s34, 1
        %s270 = smul.addr %s269, 8
        %s271 = scalar_lea.vmem [#allocation2], %s270
        // Predicated region
        $region45: #{tpu_custom_call.1} parent=43 // pred_check
          %p272 = pneg %p47
        $region46: #{tpu_custom_call.1} parent=43 // pred_check_branch
          %274 = sbr.rel (%p272) target = $region48
        $region47: #{tpu_custom_call.1} parent=43 // pred_region
          %275 = dma.done %s268, 128
        $region48: #{tpu_custom_call.1} parent=43 // pred_fallthru
          _
        %s276 = sand.u32 %s26, 1
        %s277 = scalar_lea.sflag [#allocation6], %s276
        %s278 = sand.u32 %s60, 1
        %s279 = smul.addr %s278, 8
        %s280 = scalar_lea.vmem [#allocation5], %s279
        // Predicated region
        $region49: #{tpu_custom_call.1} parent=43 // pred_check
          %p281 = pneg %p73
        $region50: #{tpu_custom_call.1} parent=43 // pred_check_branch
          %283 = sbr.rel (%p281) target = $region52
        $region51: #{tpu_custom_call.1} parent=43 // pred_region
          %284 = dma.done %s277, 128
        $region52: #{tpu_custom_call.1} parent=43 // pred_fallthru
          _
        // Predicated region
        $region53: #{tpu_custom_call.1} parent=43 // pred_check
          %p285 = pneg %p94
        $region54: #{tpu_custom_call.1} parent=43 // pred_check_branch
          %287 = sbr.rel (%p285) target = $region56
        $region55: #{tpu_custom_call.1} parent=43 // pred_region
          %288 = dma.done [#allocation6], 2048
        $region56: #{tpu_custom_call.1} parent=43 // pred_fallthru
          _
        %s289 = sand.u32 %s34, 1
        %s290 = scalar_lea.sflag [#allocation3], %s289
        %s291 = sand.u32 %s34, 1
        %s292 = smul.addr %s291, 8
        %s293 = scalar_lea.vmem [#allocation2], %s292
        %p294 = pneg %p47
        %p295 = pneg %p44
        %s296 = sand.u32 %s26, 1
        %s297 = scalar_lea.sflag [#allocation6], %s296
        %s298 = sand.u32 %s60, 1
        %s299 = smul.addr %s298, 8
        %s300 = scalar_lea.vmem [#allocation5], %s299
        %p301 = pneg %p73
        %p302 = pneg %p70
        %p303 = pneg %p94
        %p304 = pneg %p91
        %p305 = pneg %p115
        %p306 = pneg %p112
        %p307 = pneg %p136
        %p308 = pneg %p133
        %p309 = pneg %p157
        %p310 = pneg %p154
        %p311 = pneg %p183
        %p312 = pneg %p180
        %s313 = sand.u32 %s170, 1
        %s314 = scalar_lea.sflag [#allocation4], %s313
        %s315 = sand.u32 %s170, 1
        %s316 = smul.addr %s315, 8
        %s317 = scalar_lea.vmem [#allocation8], %s316
        %v318 = vld [vmem:[%s271] sm:$0xff]
        %v319 = vld [vmem:[#allocation7] sm:$0xff]
        %v320 = vld [vmem:[#allocation7 + $0x8] sm:$0xff]
        %v321 = vld [vmem:[#allocation7 + $0x10] sm:$0xff]
        %v322 = vld [vmem:[#allocation7 + $0x18] sm:$0xff]
        %v323 = vld [vmem:[#allocation7 + $0x20] sm:$0xff]
        %v324 = vld [vmem:[#allocation7 + $0x28] sm:$0xff]
        %v325 = vld [vmem:[#allocation7 + $0x30] sm:$0xff]
        %v326 = vld [vmem:[#allocation7 + $0x38] sm:$0xff]
        %v327 = vld [vmem:[#allocation7 + $0x40] sm:$0xff]
        %v328 = vld [vmem:[#allocation7 + $0x48] sm:$0xff]
        %v329 = vld [vmem:[#allocation7 + $0x50] sm:$0xff]
        %v330 = vld [vmem:[#allocation7 + $0x58] sm:$0xff]
        %v331 = vld [vmem:[#allocation7 + $0x60] sm:$0xff]
        %v332 = vld [vmem:[#allocation7 + $0x68] sm:$0xff]
        %v333 = vld [vmem:[#allocation7 + $0x70] sm:$0xff]
        %v334 = vld [vmem:[#allocation7 + $0x78] sm:$0xff]
        %v335 = vld [vmem:[%s3] sm:$0x1]
        %v337 = vlaneseq
        %v338 = vshrl.u32 %v337, 7
        %v339 = vsub.s32 0, %v338
        %v340 = vrot.slane %v335, %v339
        %342 = vmatprep.subr.mxu0 0.0
        %343 = vmatpush1.msra.mxu0 %v334
        %344 = vmatprep.subr.mxu0 0.0
        %345 = vmatpush1.msra.mxu0 %v333
        %346 = vmatprep.subr.mxu0 0.0
        %347 = vmatpush1.msra.mxu0 %v332
        %348 = vmatprep.subr.mxu0 0.0
        %349 = vmatpush1.msra.mxu0 %v331
        %350 = vmatprep.subr.mxu0 0.0
        %351 = vmatpush1.msra.mxu0 %v330
        %352 = vmatprep.subr.mxu0 0.0
        %353 = vmatpush1.msra.mxu0 %v329
        %354 = vmatprep.subr.mxu0 0.0
        %355 = vmatpush1.msra.mxu0 %v328
        %356 = vmatprep.subr.mxu0 0.0
        %357 = vmatpush1.msra.mxu0 %v327
        %358 = vmatprep.subr.mxu0 0.0
        %359 = vmatpush1.msra.mxu0 %v326
        %360 = vmatprep.subr.mxu0 0.0
        %361 = vmatpush1.msra.mxu0 %v325
        %362 = vmatprep.subr.mxu0 0.0
        %363 = vmatpush1.msra.mxu0 %v324
        %364 = vmatprep.subr.mxu0 0.0
        %365 = vmatpush1.msra.mxu0 %v323
        %366 = vmatprep.subr.mxu0 0.0
        %367 = vmatpush1.msra.mxu0 %v322
        %368 = vmatprep.subr.mxu0 0.0
        %369 = vmatpush1.msra.mxu0 %v321
        %370 = vmatprep.subr.mxu0 0.0
        %371 = vmatpush1.msra.mxu0 %v320
        %372 = vmatprep.subr.mxu0 0.0
        %373 = vmatpush1.msra.mxu0 %v319
        %374 = vmatprep.subr.mxu0 0.0
        %375 = vmatpush2.msra.mxu0 0.0
        %376 = vmatprep.subr.mxu0 0.0
        %377 = vmatpush2.msra.mxu0 0.0
        %378 = vmatprep.subr.mxu0 0.0
        %379 = vmatpush2.msra.mxu0 0.0
        %380 = vmatprep.subr.mxu0 0.0
        %381 = vmatpush2.msra.mxu0 0.0
        %382 = vmatprep.subr.mxu0 0.0
        %383 = vmatpush2.msra.mxu0 0.0
        %384 = vmatprep.subr.mxu0 0.0
        %385 = vmatpush2.msra.mxu0 0.0
        %386 = vmatprep.subr.mxu0 0.0
        %387 = vmatpush2.msra.mxu0 0.0
        %388 = vmatprep.subr.mxu0 0.0
        %389 = vmatpush2.msra.mxu0 0.0
        %390 = vmatprep.subr.mxu0 0.0
        %391 = vmatpush2.msra.mxu0 0.0
        %392 = vmatprep.subr.mxu0 0.0
        %393 = vmatpush2.msra.mxu0 0.0
        %394 = vmatprep.subr.mxu0 0.0
        %395 = vmatpush2.msra.mxu0 0.0
        %396 = vmatprep.subr.mxu0 0.0
        %397 = vmatpush2.msra.mxu0 0.0
        %398 = vmatprep.subr.mxu0 0.0
        %399 = vmatpush2.msra.mxu0 0.0
        %400 = vmatprep.subr.mxu0 0.0
        %401 = vmatpush2.msra.mxu0 0.0
        %402 = vmatprep.subr.mxu0 0.0
        %403 = vmatpush2.msra.mxu0 0.0
        %404 = vmatprep.subr.mxu0 0.0
        %405 = vmatpush2.msra.mxu0 0.0
        %406 = vmatprep.mubr.f32.mxu0 0.0
        %407 = vmatmul.mubr.f32.gmra.mxu0 %v318
        %v408 = vpop.f32.mrf.mxu0
        %v409 = vadd.f32 %v340, %v408
        %v410 = vpop.f32.mrf.mxu0
        %411 = vdwg.mxu0
        %v412 = vld [vmem:[%s280] sm:$0xff]
        %v413 = vadd.f32 %v409, %v412
        %414 = vadd.xlane.f32.xlu0 %v413
        %v415 = vpop.xlane.xlu0 %414
        %v416 = vrcp.pop 128.0
        %v417 = vmul.f32 %v415, %v416
        %v418 = vsub.f32 %v413, %v417
        %v419 = vmul.f32 %v418, %v418
        %420 = vadd.xlane.f32.xlu0 %v419
        %v421 = vpop.xlane.xlu0 %420
        %v422 = vmul.f32 %v421, %v416
        %v423 = vadd.f32 %v422, 1e-12
        %v424 = vrsqrt.pop %v423
        %v425 = vmul.f32 %v418, %v424
        %v426 = vld [vmem:[%s4] sm:$0x1]
        %v428 = vlaneseq
        %v429 = vshrl.u32 %v428, 7
        %v430 = vsub.s32 0, %v429
        %v431 = vrot.slane %v426, %v430
        %v433 = vmul.f32 %v425, %v431
        %v434 = vld [vmem:[%s5] sm:$0x1]
        %v436 = vlaneseq
        %v437 = vshrl.u32 %v436, 7
        %v438 = vsub.s32 0, %v437
        %v439 = vrot.slane %v434, %v438
        %v441 = vadd.f32 %v433, %v439
        %442 = vst [vmem:[%s317] sm:$0xff] %v441
        %s443 = sand.u32 %s170, 1
        %s444 = scalar_lea.sflag [#allocation4], %s443
        %s445 = sand.u32 %s170, 1
        %s446 = smul.addr %s445, 8
        %s447 = scalar_lea.vmem [#allocation8], %s446
        // Predicated region
        $region57: #{tpu_custom_call.1} parent=43 // pred_check
          %p448 = pneg %p180
        $region58: #{tpu_custom_call.1} parent=43 // pred_check_branch
          %450 = sbr.rel (%p448) target = $region60
        $region59: #{tpu_custom_call.1} parent=43 // pred_region
          %s452 = ssub.s32 128, 128
          %453 = vsyncadd %s444, %s452
          %s454 = smul.addr %s26, 128
          %s455 = scalar_lea.hbm %s6, %s454
          %s457 = sshll.u32 %s447, 4
          %s458 = int_to_ptr.vmem [resolvable:$true] %s457
          %460 = dma.vmem_to_hbm [thread:$0]  %s458, 128, %s455, %s444
        $region60: #{tpu_custom_call.1} parent=43 // pred_fallthru
          _
      $region44: #{tpu_custom_call.1} parent=5 // pred_fallthru
        _
      %p461 = scmp.le.s32.totalorder 2, %s21
      // Predicated region
      $region61: #{tpu_custom_call.1} parent=5 // pred_check
        %p462 = pneg %p461
      $region62: #{tpu_custom_call.1} parent=5 // pred_check_branch
        %464 = sbr.rel (%p462) target = $region64
      $region63: #{tpu_custom_call.1} parent=5 // pred_region
        %s465 = ssub.s32 %s21, 2
        // Predicated region
        $region65: #{tpu_custom_call.1} parent=63 // pred_check
          %p466 = pneg %p186
        $region66: #{tpu_custom_call.1} parent=63 // pred_check_branch
          %468 = sbr.rel (%p466) target = $region68
        $region67: #{tpu_custom_call.1} parent=63 // pred_region
          %s469 = sand.u32 %s171, 1
          %s470 = scalar_lea.sflag [#allocation4], %s469
          %s471 = sand.u32 %s171, 1
          %s472 = smul.addr %s471, 8
          %s473 = scalar_lea.vmem [#allocation8], %s472
          %474 = dma.done %s470, 128
        $region68: #{tpu_custom_call.1} parent=63 // pred_fallthru
          _
      $region64: #{tpu_custom_call.1} parent=5 // pred_fallthru
        _
    $region6: #{tpu_custom_call.1} parent=1 // loop_footer
      %s25 = sadd.s32 1, %s21
    $region7: #{tpu_custom_call.1} parent=1 // loop_footer_branch
      %20 = sbr.rel target = $region3
    $region8: #{tpu_custom_call.1} parent=1 // loop_exit
      _
    %475 = vsyncpa [#allocation3], 1
    %s476 = scalar_lea.sflag [#allocation3], 1
    %477 = vsyncpa %s476, 1
    %478 = vsyncpa [#allocation6], 1
    %s479 = scalar_lea.sflag [#allocation6], 1
    %480 = vsyncpa %s479, 1
    %481 = vsyncpa [#allocation4], 1
    %s482 = scalar_lea.sflag [#allocation4], 1
    %483 = vsyncpa %s482, 1

</llo_original>
